<compile_context>
chip_gen: v5e
topology: v5e:2x2
jax: 0.10.0
libtpu: 0.0.40
codegen_flags: <defaults>
</compile_context>

<pallas_src>
import functools

import jax
import jax.numpy as jnp
from jax.experimental import pallas as pl
from jax.experimental.pallas import tpu as pltpu

_LANE = 128
_CHUNK = 512                       # lanes per inner chunk (vreg-resident working set)
_D_IN, _D_H1, _D_H2, _D_OUT = 2, 16, 32, 1

# Packed-parameter layout: one (48, 18) f32 constant (single BlockSpec / DMA).
#   rows  0:32, lanes 0:16 -> W2 (32,16)
#   rows  0:32, lane   16  -> b2 (32,)
#   rows  0:32, lane   17  -> w3 (32,)    (layer-3 weight as a column)
#   rows 32:48, lane    0  -> W1[:,0]
#   rows 32:48, lane    1  -> W1[:,1]
#   rows 32:48, lane    2  -> b1 (16,)
#   row  32,    lane    3  -> b3 (scalar)
_P_ROWS, _P_COLS = 48, 18


def _pack_params(params):
    """Pack the six torch-layout params ((out,in) weights, (out,) biases)."""
    w1, b1, w2, b2, w3, b3 = params
    p = jnp.zeros((_P_ROWS, _P_COLS), jnp.float32)
    p = p.at[0:32, 0:16].set(w2.astype(jnp.float32))
    p = p.at[0:32, 16].set(b2.astype(jnp.float32))
    p = p.at[0:32, 17].set(w3[0].astype(jnp.float32))
    p = p.at[32:48, 0].set(w1[:, 0].astype(jnp.float32))
    p = p.at[32:48, 1].set(w1[:, 1].astype(jnp.float32))
    p = p.at[32:48, 2].set(b1.astype(jnp.float32))
    p = p.at[32, 3].set(b3[0].astype(jnp.float32))
    return p


def _mlp_kernel(x_ref, p_ref, o_ref, *, chunk):
    # ---- Hoisted, loop-invariant parameter loads / casts (once per step) ----
    w2_bf = p_ref[0:32, 0:16].astype(jnp.bfloat16)    # (32,16) single-pass MXU LHS
    b2    = p_ref[0:32, 16:17]                        # (32,1)
    w3    = p_ref[0:32, 17:18]                        # (32,1)
    w1a   = p_ref[32:48, 0:1]                         # (16,1)
    w1b   = p_ref[32:48, 1:2]                         # (16,1)
    b1    = p_ref[32:48, 2:3]                         # (16,1)
    b3    = p_ref[32:33, 3:4]                         # (1,1)

    tb = x_ref.shape[1]
    # Fully-unrolled chunk loop with *static* lane offsets (no dynamic
    # minor-dim slicing); per-chunk intermediates stay in vregs, so the
    # (16,TB)/(32,TB) full-tile temporaries of the naive version never hit
    # VMEM.  Chunk count is bounded (<= 64) by the batch-tile cap.
    for j in range(0, tb, chunk):
        x0 = x_ref[0:1, j:j + chunk]                  # (1, chunk)
        x1 = x_ref[1:2, j:j + chunk]                  # (1, chunk)

        # Layer 1: Linear(2->16) + ReLU.  K=2 is degenerate for the MXU, so do
        # it as two VPU broadcast-FMAs (outer products).
        h1 = jnp.maximum(w1a * x0 + w1b * x1 + b1, 0.0)           # (16, chunk) f32

        # Layer 2: Linear(16->32) + ReLU on the MXU.  bf16 operands -> single
        # MXU pass (f32 would decompose into multiple bf16 passes on the vex
        # slot); accumulate in f32.  Batch stays on the MXU N / lane axis.
        h2 = jnp.dot(w2_bf, h1.astype(jnp.bfloat16),
                     preferred_element_type=jnp.float32) + b2
        h2 = jnp.maximum(h2, 0.0)                                  # (32, chunk)

        # Layer 3: Linear(32->1).  out=1 is degenerate for the MXU -> VPU
        # multiply + XLU cross-sublane reduce.
        z = jnp.sum(w3 * h2, axis=0, keepdims=True) + b3           # (1, chunk)

        # Sigmoid: exp on the EUP, approximate reciprocal also on the EUP
        # (~1e-4 accuracy cost; the VALU slot is the busy one, EUP is idle).
        o_ref[0:1, j:j + chunk] = pl.reciprocal(
            1.0 + jnp.exp(-z), approx=True).astype(o_ref.dtype)


def discriminator_forward(x, params, *, batch_tile=32768):
    """x: (N, 2) float32.  Returns (N, 1) float32 in [0, 1]."""
    n, d_in = x.shape
    assert d_in == _D_IN
    assert batch_tile % _LANE == 0, "batch_tile must be a multiple of 128"

    n_lane = pl.cdiv(n, _LANE) * _LANE
    # Keep >= 2 grid steps whenever the batch allows it: enables BlockSpec
    # double-buffering of the x/out DMAs and v7x megacore sharding of the
    # "parallel" batch axis.  The 32K default tile keeps per-step VMEM ~4 MiB
    # (well under v7x's 32 MiB default scoped limit) while making per-step
    # compute >> the ~0.35us fixed grid-step overhead.
    if n_lane >= 2 * _LANE:
        tb_cap = pl.cdiv(pl.cdiv(n_lane, 2), _LANE) * _LANE
    else:
        tb_cap = n_lane
    tb = min(batch_tile, tb_cap)
    chunk = next(c for c in (_CHUNK, 256, _LANE) if tb % c == 0)

    n_tiles = pl.cdiv(n_lane, tb)
    n_pad = n_tiles * tb

    p = _pack_params(params)

    # Feature-major layout: pad + transpose in the wrapper (layout plumbing,
    # not in-kernel compute).  Zero-padded columns are sliced off at the end.
    # TODO(synk): upstream producers can hand activations over already in
    # feature-major (2, N) layout to skip this extra HBM pad+transpose pass.
    xt = jnp.pad(x, ((0, n_pad - n), (0, 0))).T                    # (2, n_pad)

    flops = 2 * n_pad * (_D_IN * _D_H1 + _D_H1 * _D_H2 + _D_H2 * _D_OUT)
    bytes_accessed = 4 * (n_pad * (_D_IN + _D_OUT) + _P_ROWS * _P_COLS)

    out_t = pl.pallas_call(
        functools.partial(_mlp_kernel, chunk=chunk),
        out_shape=jax.ShapeDtypeStruct((_D_OUT, n_pad), jnp.float32),
        grid_spec=pltpu.PrefetchScalarGridSpec(
            num_scalar_prefetch=0,
            grid=(n_tiles,),
            in_specs=[
                pl.BlockSpec((_D_IN, tb), lambda i: (0, i)),       # x tile (2, TB)
                pl.BlockSpec((_P_ROWS, _P_COLS), lambda i: (0, 0)),  # packed params
            ],
            out_specs=pl.BlockSpec((_D_OUT, tb), lambda i: (0, i)),
        ),
        compiler_params=pltpu.CompilerParams(
            dimension_semantics=("parallel",),      # megacore-shardable on v7x
        ),
        cost_estimate=pl.CostEstimate(
            flops=flops, transcendentals=2 * n_pad, bytes_accessed=bytes_accessed),
    )(xt, p)

    return out_t[:, :n].T                                          # (N, 1)


def init_params(key):
    """Deterministic init matching torch.nn.Linear (weights stored (out, in))."""
    dims = [(_D_IN, _D_H1), (_D_H1, _D_H2), (_D_H2, _D_OUT)]
    params = []
    for fan_in, fan_out in dims:
        key, kw, kb = jax.random.split(key, 3)
        bound = fan_in ** -0.5
        w = jax.random.uniform(kw, (fan_out, fan_in), jnp.float32, -bound, bound)
        b = jax.random.uniform(kb, (fan_out,), jnp.float32, -bound, bound)
        params += [w, b]
    return tuple(params)


def _reference_forward(x, params):
    w1, b1, w2, b2, w3, b3 = params
    h1 = jnp.maximum(x @ w1.T + b1, 0.0)
    h2 = jnp.maximum(h1 @ w2.T + b2, 0.0)
    z = h2 @ w3.T + b3
    return 1.0 / (1.0 + jnp.exp(-z))


if __name__ == "__main__":
    key = jax.random.PRNGKey(0)
    key, kx1, kx2 = jax.random.split(key, 3)
    params = init_params(key)

    fwd = jax.jit(discriminator_forward)

    # Tolerance reflects the bf16 layer-2 MXU matmul + approx EUP reciprocal
    # (review-sanctioned tradeoff); f32-exact variant would hold 1e-5.
    tol = 5e-3

    # Case 1: small ragged batch -> exercises 128-lane padding and a 2-step
    # pipelined grid (tb=128, 1 chunk/step).
    x1 = jax.random.normal(kx1, (200, _D_IN), jnp.float32)
    out1 = jax.block_until_ready(fwd(x1, params))
    ref1 = _reference_forward(x1, params)
    assert out1.shape == (200, 1), out1.shape
    err1 = float(jnp.max(jnp.abs(out1 - ref1)))
    assert err1 < tol, err1

    # Case 2: larger ragged batch -> exercises the multi-chunk inner loop
    # (tb=1536, 3 x 512-lane chunks/step, 2 grid steps).
    x2 = jax.random.normal(kx2, (3000, _D_IN), jnp.float32)
    out2 = jax.block_until_ready(fwd(x2, params))
    ref2 = _reference_forward(x2, params)
    assert out2.shape == (3000, 1), out2.shape
    err2 = float(jnp.max(jnp.abs(out2 - ref2)))
    assert err2 < tol, err2

    print("KERNEL_OK")
</pallas_src>

<mosaic_0001>
module attributes {stable_mosaic.version = 11 : i64} {
  func.func @_mlp_kernel(%arg0: i32, %arg1: memref<2x128xf32, #tpu.memory_space<vmem>>, %arg2: memref<48x18xf32, #tpu.memory_space<vmem>>, %arg3: memref<1x128xf32, #tpu.memory_space<vmem>>) attributes {dimension_semantics = [#tpu.dimension_semantics<parallel>], iteration_bounds = array<i64: 2>, scalar_prefetch = 0 : i64, scratch_operands = 0 : i64, tpu.core_type = #tpu.core_type<tc>, window_params = [{transform_indices = @transform_0, window_bounds = array<i64: 2, 128>}, {pipeline_mode = #tpu.pipeline_mode<synchronous>, transform_indices = @transform_1, window_bounds = array<i64: 48, 18>}, {transform_indices = @transform_2, window_bounds = array<i64: 1, 128>}]} {
    %c0 = arith.constant 0 : index
    %c0_0 = arith.constant 0 : index
    %0 = vector.load %arg2[%c0, %c0_0] : memref<48x18xf32, #tpu.memory_space<vmem>>, vector<32x16xf32>
    %1 = arith.truncf %0 : vector<32x16xf32> to vector<32x16xbf16>
    %c0_1 = arith.constant 0 : index
    %c16 = arith.constant 16 : index
    %2 = vector.load %arg2[%c0_1, %c16] : memref<48x18xf32, #tpu.memory_space<vmem>>, vector<32x1xf32>
    %c0_2 = arith.constant 0 : index
    %c17 = arith.constant 17 : index
    %3 = vector.load %arg2[%c0_2, %c17] : memref<48x18xf32, #tpu.memory_space<vmem>>, vector<32x1xf32>
    %c32 = arith.constant 32 : index
    %c0_3 = arith.constant 0 : index
    %4 = vector.load %arg2[%c32, %c0_3] : memref<48x18xf32, #tpu.memory_space<vmem>>, vector<16x1xf32>
    %c32_4 = arith.constant 32 : index
    %c1 = arith.constant 1 : index
    %5 = vector.load %arg2[%c32_4, %c1] : memref<48x18xf32, #tpu.memory_space<vmem>>, vector<16x1xf32>
    %c32_5 = arith.constant 32 : index
    %c2 = arith.constant 2 : index
    %6 = vector.load %arg2[%c32_5, %c2] : memref<48x18xf32, #tpu.memory_space<vmem>>, vector<16x1xf32>
    %c32_6 = arith.constant 32 : index
    %c3 = arith.constant 3 : index
    %7 = vector.load %arg2[%c32_6, %c3] : memref<48x18xf32, #tpu.memory_space<vmem>>, vector<1x1xf32>
    %c0_7 = arith.constant 0 : index
    %c0_8 = arith.constant 0 : index
    %8 = vector.load %arg1[%c0_7, %c0_8] : memref<2x128xf32, #tpu.memory_space<vmem>>, vector<1x128xf32>
    %c1_9 = arith.constant 1 : index
    %c0_10 = arith.constant 0 : index
    %9 = vector.load %arg1[%c1_9, %c0_10] : memref<2x128xf32, #tpu.memory_space<vmem>>, vector<1x128xf32>
    %10 = vector.broadcast %4 : vector<16x1xf32> to vector<16x128xf32>
    %11 = vector.broadcast %8 : vector<1x128xf32> to vector<16x128xf32>
    %12 = arith.mulf %10, %11 : vector<16x128xf32>
    %13 = vector.broadcast %5 : vector<16x1xf32> to vector<16x128xf32>
    %14 = vector.broadcast %9 : vector<1x128xf32> to vector<16x128xf32>
    %15 = arith.mulf %13, %14 : vector<16x128xf32>
    %16 = arith.addf %12, %15 : vector<16x128xf32>
    %17 = vector.broadcast %6 : vector<16x1xf32> to vector<16x128xf32>
    %18 = arith.addf %16, %17 : vector<16x128xf32>
    %cst = arith.constant 0.000000e+00 : f32
    %19 = vector.broadcast %cst : f32 to vector<16x128xf32>
    %20 = arith.maximumf %18, %19 : vector<16x128xf32>
    %21 = arith.truncf %20 : vector<16x128xf32> to vector<16x128xbf16>
    %cst_11 = arith.constant dense<0.000000e+00> : vector<32x128xf32>
    %22 = tpu.matmul %1, %21, %cst_11 {dimension_numbers = #tpu.dot_dimension_numbers<[1], [0], [0], [1], [0, 0, 1, 1], [], []>} : vector<32x16xbf16>, vector<16x128xbf16>, vector<32x128xf32> -> vector<32x128xf32>
    %23 = vector.broadcast %2 : vector<32x1xf32> to vector<32x128xf32>
    %24 = arith.addf %22, %23 : vector<32x128xf32>
    %cst_12 = arith.constant 0.000000e+00 : f32
    %25 = vector.broadcast %cst_12 : f32 to vector<32x128xf32>
    %26 = arith.maximumf %24, %25 : vector<32x128xf32>
    %27 = vector.broadcast %3 : vector<32x1xf32> to vector<32x128xf32>
    %28 = arith.mulf %27, %26 : vector<32x128xf32>
    %cst_13 = arith.constant dense<0.000000e+00> : vector<128xf32>
    %29 = vector.multi_reduction <add>, %28, %cst_13 [0] : vector<32x128xf32> to vector<128xf32>
    %30 = vector.shape_cast %29 : vector<128xf32> to vector<1x128xf32>
    %31 = vector.broadcast %7 : vector<1x1xf32> to vector<1x128xf32>
    %32 = arith.addf %30, %31 : vector<1x128xf32>
    %cst_14 = arith.constant 0.000000e+00 : f32
    %33 = vector.broadcast %cst_14 : f32 to vector<1x128xf32>
    %34 = arith.subf %33, %32 : vector<1x128xf32>
    %35 = math.exp %34 : vector<1x128xf32>
    %cst_15 = arith.constant 1.000000e+00 : f32
    %36 = vector.broadcast %cst_15 : f32 to vector<1x128xf32>
    %37 = arith.addf %36, %35 : vector<1x128xf32>
    %38 = tpu.reciprocal %37 {approx = true} : vector<1x128xf32> -> vector<1x128xf32>
    %c0_16 = arith.constant 0 : index
    %c0_17 = arith.constant 0 : index
    %39 = vector.load %arg3[%c0_16, %c0_17] : memref<1x128xf32, #tpu.memory_space<vmem>>, vector<1x128xf32>
    tpu.vector_store %arg3[%c0_16, %c0_17], %38 {strides = array<i32>} : memref<1x128xf32, #tpu.memory_space<vmem>>, vector<1x128xf32>,
    return
  }
  func.func @transform_0(%arg0: i32) -> (i32, i32) {
    %c0_i32 = arith.constant 0 : i32
    %c0_i32_0 = arith.constant 0 : i32
    return %c0_i32, %arg0 : i32, i32
  }
  func.func @transform_1(%arg0: i32) -> (i32, i32) {
    %c0_i32 = arith.constant 0 : i32
    %c0_i32_0 = arith.constant 0 : i32
    %c0_i32_1 = arith.constant 0 : i32
    return %c0_i32, %c0_i32_0 : i32, i32
  }
  func.func @transform_2(%arg0: i32) -> (i32, i32) {
    %c0_i32 = arith.constant 0 : i32
    %c0_i32_0 = arith.constant 0 : i32
    return %c0_i32, %arg0 : i32, i32
  }
}

</mosaic_0001>

<llo_original>
// kernel: discriminator_forward.1
$region0: #{discriminator_forward.1}
  #allocation0 [shape = 'u32[]', space=smem, size = 0x4, offset = 0x4, fixed_abs, tag = 'smem constant byte address 0x4 - core index']
  #allocation1 [shape = 'u32[72,128]{1,0:T(1,128)}', space=vmem, size = 0x9000, scoped, tag = 'internal scratch']
  %s0 = inlined_call_operand.vmem [shape: f32[2,256], index: 0, kind: input, shape index: {}]
  %s1 = inlined_call_operand.vmem [shape: f32[48,18], index: 1, kind: input, shape index: {}]
  %s2 = inlined_call_operand.vmem [shape: f32[1,256], index: 2, kind: output, shape index: {}]
  %s3 = sld [smem:[#allocation0]]
  $region41: #{discriminator_forward.1} parent=0
    _
  %s5 = ssub.s32 1, %s3
  %s6 = scalar_select 0, %s5, %s3
  loop: start=0, step=1, limit=4
  $region2: #{discriminator_forward.1} parent=0 // loop_pre_header
    _
  $region3: #{discriminator_forward.1} parent=0 // loop_header
    %s8 = sphi 0, %s12
    %p9 = scmp.ge.s32.totalorder %s8, 4
    %s18 = sphi 0, %s20
    %s21 = sphi 0, %s18
    %s22 = sphi 0, %s21
    %s38 = sphi 0, %s22
    %s42 = sphi 0, %s42
    %s44 = sphi 0, %s42
    %s45 = sphi 0, %s44
    %s59 = sphi 0, %s45
    %s65 = sphi 0, %s67
    %s68 = sphi 0, %s65
    %s69 = sphi 0, %s68
    %s85 = sphi 0, %s69
  $region4: #{discriminator_forward.1} parent=0 // loop_header_branch
    %11 = sbr.rel (%p9) target = $region8
  $region5: #{discriminator_forward.1} parent=0 // loop_body
    %s13 = ssub.s32 %s8, 1
    %s14 = ssub.s32 %s8, 2
    %s15 = sadd.s32 %s8, 1
    %s16 = ssub.s32 %s8, %s15
    %p17 = scmp.eq.s32.totalorder %s16, 0
    %s19 = sadd.s32 %s18, 1
    %s20 = scalar_select %p17, %s18, %s19
    %p23 = pneg %p17
    %p24 = scmp.eq.s32.totalorder %s8, 1
    %p25 = por %p23, %p24
    %p26 = scmp.ne.s32.totalorder %s18, %s21
    %p27 = scmp.eq.s32.totalorder %s8, 0
    %p28 = por %p26, %p27
    %p29 = scmp.ne.s32.totalorder %s18, %s21
    %p30 = scmp.eq.s32.totalorder %s13, 1
    %p31 = por %p29, %p30
    %p32 = scmp.ne.s32.totalorder %s21, %s22
    %p33 = scmp.eq.s32.totalorder %s13, 0
    %p34 = por %p32, %p33
    %p35 = scmp.ne.s32.totalorder %s21, %s22
    %p36 = scmp.eq.s32.totalorder %s14, 1
    %p37 = por %p35, %p36
    %p39 = scmp.ne.s32.totalorder %s22, %s38
    %p40 = scmp.eq.s32.totalorder %s14, 0
    %p41 = por %p39, %p40
    %s43 = sadd.s32 %s42, 1
    %p46 = scmp.eq.s32.totalorder %s8, 1
    %p47 = scmp.ne.s32.totalorder %s42, %s44
    %p48 = scmp.eq.s32.totalorder %s8, 0
    %p49 = por %p47, %p48
    %p50 = scmp.ne.s32.totalorder %s42, %s44
    %p51 = scmp.eq.s32.totalorder %s13, 1
    %p52 = por %p50, %p51
    %p53 = scmp.ne.s32.totalorder %s44, %s45
    %p54 = scmp.eq.s32.totalorder %s13, 0
    %p55 = por %p53, %p54
    %p56 = scmp.ne.s32.totalorder %s44, %s45
    %p57 = scmp.eq.s32.totalorder %s14, 1
    %p58 = por %p56, %p57
    %p60 = scmp.ne.s32.totalorder %s45, %s59
    %p61 = scmp.eq.s32.totalorder %s14, 0
    %p62 = por %p60, %p61
    %s63 = ssub.s32 %s8, %s15
    %p64 = scmp.eq.s32.totalorder %s63, 0
    %s66 = sadd.s32 %s65, 1
    %s67 = scalar_select %p64, %s65, %s66
    %p70 = pneg %p64
    %p71 = scmp.eq.s32.totalorder %s8, 1
    %p72 = por %p70, %p71
    %p73 = scmp.ne.s32.totalorder %s65, %s68
    %p74 = scmp.eq.s32.totalorder %s8, 0
    %p75 = por %p73, %p74
    %p76 = scmp.ne.s32.totalorder %s65, %s68
    %p77 = scmp.eq.s32.totalorder %s13, 1
    %p78 = por %p76, %p77
    %p79 = scmp.ne.s32.totalorder %s68, %s69
    %p80 = scmp.eq.s32.totalorder %s13, 0
    %p81 = por %p79, %p80
    %p82 = scmp.ne.s32.totalorder %s68, %s69
    %p83 = scmp.eq.s32.totalorder %s14, 1
    %p84 = por %p82, %p83
    %p86 = scmp.ne.s32.totalorder %s69, %s85
    %p87 = scmp.eq.s32.totalorder %s14, 0
    %p88 = por %p86, %p87
    %p89 = scmp.le.s32.totalorder 1, %s8
    %p90 = scmp.lt.s32.totalorder %s8, 3
    %p91 = pnand %p89, %p90
    %p92 = pneg %p91
    // Predicated region
    $region9: #{discriminator_forward.1} parent=5 // pred_check
      _
    $region10: #{discriminator_forward.1} parent=5 // pred_check_branch
      %94 = sbr.rel (%p91) target = $region12
    $region11: #{discriminator_forward.1} parent=5 // pred_region
      %s95 = ssub.s32 %s8, 1
      // Predicated region
      $region13: #{discriminator_forward.1} parent=11 // pred_check
        %p96 = pneg %p55
      $region14: #{discriminator_forward.1} parent=11 // pred_check_branch
        %98 = sbr.rel (%p96) target = $region16
      $region15: #{discriminator_forward.1} parent=11 // pred_region
        _
      $region16: #{discriminator_forward.1} parent=11 // pred_fallthru
        _
    $region12: #{discriminator_forward.1} parent=5 // pred_fallthru
      _
    %p99 = scmp.lt.s32.totalorder %s8, 2
    // Predicated region
    $region17: #{discriminator_forward.1} parent=5 // pred_check
      %p100 = pneg %p99
    $region18: #{discriminator_forward.1} parent=5 // pred_check_branch
      %102 = sbr.rel (%p100) target = $region20
    $region19: #{discriminator_forward.1} parent=5 // pred_region
      // Predicated region
      $region21: #{discriminator_forward.1} parent=19 // pred_check
        %p103 = pneg %p28
      $region22: #{discriminator_forward.1} parent=19 // pred_check_branch
        %105 = sbr.rel (%p103) target = $region24
      $region23: #{discriminator_forward.1} parent=19 // pred_region
        %p106 = scmp.lt.s32.totalorder %s8, 1
        %s107 = scalar_select %p106, %s8, 1
        %s108 = smul.addr %s107, 2
        %s109 = scalar_lea.vmem %s0, %s108
      $region24: #{discriminator_forward.1} parent=19 // pred_fallthru
        _
    $region20: #{discriminator_forward.1} parent=5 // pred_fallthru
      _
    %p110 = scmp.le.s32.totalorder 1, %s8
    %p111 = scmp.lt.s32.totalorder %s8, 3
    %p112 = pnand %p110, %p111
    %p113 = pneg %p112
    // Predicated region
    $region25: #{discriminator_forward.1} parent=5 // pred_check
      _
    $region26: #{discriminator_forward.1} parent=5 // pred_check_branch
      %115 = sbr.rel (%p112) target = $region28
    $region27: #{discriminator_forward.1} parent=5 // pred_region
      %s116 = ssub.s32 %s8, 1
      %p117 = scmp.lt.s32.totalorder %s13, 1
      %s118 = scalar_select %p117, %s13, 1
      %s119 = smul.addr %s118, 2
      %s120 = scalar_lea.vmem %s0, %s119
      %p121 = pneg %p34
      %p122 = pneg %p31
      %p123 = pneg %p55
      %p124 = pneg %p52
      %p125 = pneg %p81
      %p126 = pneg %p78
      %p127 = scmp.lt.s32.totalorder %s13, 1
      %s128 = scalar_select %p127, %s13, 1
      %s129 = scalar_lea.vmem %s2, %s128
      %p130 = scmp.lt.s32.totalorder %s13, 1
      %s131 = scalar_select %p130, %s13, 1
      %s132 = smul.addr %s131, 2
      %s133 = scalar_lea.vmem %s0, %s132
      %p134 = scmp.lt.s32.totalorder %s13, 1
      %s135 = scalar_select %p134, %s13, 1
      %s136 = scalar_lea.vmem %s2, %s135
      %v138 = vld [vmem:[%s1] sm:$0xff]
      %v139 = vld [vmem:[%s1 + $0x8] sm:$0xff]
      %v140 = vld [vmem:[%s1 + $0x10] sm:$0xff]
      %v141 = vld [vmem:[%s1 + $0x18] sm:$0xff]
      %v142 = vpack.c.bf16 %v139, %v138
      %v143 = vpack.c.bf16 %v141, %v140
      %v144 = vld [vmem:[%s1 + $0x20] sm:$0xff]
      %v145 = vld [vmem:[%s1 + $0x28] sm:$0xff]
      %v146 = vld [vmem:[%s1 + $0x20] sm:$0x1]
      %v147 = vld [vmem:[%s133] sm:$0x1]
      %v148 = vld [vmem:[%s133 + $0x1] sm:$0x1]
      %150 = vset.pattern.permute.xlu0 0
      %151 = vperm.xlu0 %150, %v144
      %v152 = vpop.permute.xlu0 %151
      %155 = vset.pattern.permute.xlu0 0
      %156 = vperm.xlu0 %155, %v145
      %v157 = vpop.permute.xlu0 %156
      %v159 = vperm.slane %v147, 0
      %v160 = vmul.f32 %v152, %v159
      %v161 = vmul.f32 %v157, %v159
      %162 = vset.pattern.permute.xlu0 1
      %163 = vperm.xlu0 %162, %v144
      %v164 = vpop.permute.xlu0 %163
      %166 = vset.pattern.permute.xlu0 1
      %167 = vperm.xlu0 %166, %v145
      %v168 = vpop.permute.xlu0 %167
      %v170 = vperm.slane %v148, 0
      %v171 = vmul.f32 %v164, %v170
      %v172 = vmul.f32 %v168, %v170
      %v173 = vadd.f32 %v160, %v171
      %v174 = vadd.f32 %v161, %v172
      %175 = vset.pattern.permute.xlu0 2
      %176 = vperm.xlu0 %175, %v144
      %v177 = vpop.permute.xlu0 %176
      %179 = vset.pattern.permute.xlu0 2
      %180 = vperm.xlu0 %179, %v145
      %v181 = vpop.permute.xlu0 %180
      %v183 = vadd.f32 %v173, %v177
      %v184 = vadd.f32 %v174, %v181
      %v185 = vmax.f32 %v183, 0.0
      %v186 = vmax.f32 %v184, 0.0
      %v187 = vpack.c.bf16 %v186, %v185
      %189 = vset.pattern.permute.xlu0 16
      %190 = vperm.xlu0 %189, %v138
      %v191 = vpop.permute.xlu0 %190
      %194 = vset.pattern.permute.xlu0 16
      %195 = vperm.xlu0 %194, %v139
      %v196 = vpop.permute.xlu0 %195
      %199 = vset.pattern.permute.xlu0 16
      %200 = vperm.xlu0 %199, %v140
      %v201 = vpop.permute.xlu0 %200
      %204 = vset.pattern.permute.xlu0 16
      %205 = vperm.xlu0 %204, %v141
      %v206 = vpop.permute.xlu0 %205
      %vm208 = vcmask 130048
      %v210 = vsel %vm208, %v142, 0
      %v213 = vsel %vm208, %v143, 0
      %215 = vmatpush.bf16.msra.mxu0 0
      %216 = vmatpush.bf16.msra.mxu0 0
      %217 = vmatpush.bf16.msra.mxu0 0
      %218 = vmatpush.bf16.msra.mxu0 0
      %219 = vmatpush.bf16.msra.mxu0 0
      %220 = vmatpush.bf16.msra.mxu0 0
      %221 = vmatpush.bf16.msra.mxu0 0
      %222 = vmatpush.bf16.msra.mxu0 %v187
      %223 = vmatmul.bf16.gmra.mxu0 %v210
      %v224 = vpop.f32.mrf.mxu0
      %v225 = vadd.f32 %v191, %v224
      %v226 = vpop.f32.mrf.mxu0
      %v227 = vadd.f32 %v196, %v226
      %228 = vmatmul.bf16.gmra.mxu0 %v213
      %v229 = vpop.f32.mrf.mxu0
      %v230 = vadd.f32 %v201, %v229
      %v231 = vpop.f32.mrf.mxu0
      %v232 = vadd.f32 %v206, %v231
      %233 = vdwg.mxu0
      %v234 = vmax.f32 %v225, 0.0
      %v235 = vmax.f32 %v227, 0.0
      %v236 = vmax.f32 %v230, 0.0
      %v237 = vmax.f32 %v232, 0.0
      %238 = vset.pattern.permute.xlu0 17
      %239 = vperm.xlu0 %238, %v138
      %v240 = vpop.permute.xlu0 %239
      %242 = vset.pattern.permute.xlu0 17
      %243 = vperm.xlu0 %242, %v139
      %v244 = vpop.permute.xlu0 %243
      %246 = vset.pattern.permute.xlu0 17
      %247 = vperm.xlu0 %246, %v140
      %v248 = vpop.permute.xlu0 %247
      %250 = vset.pattern.permute.xlu0 17
      %251 = vperm.xlu0 %250, %v141
      %v252 = vpop.permute.xlu0 %251
      %v254 = vmul.f32 %v240, %v234
      %v255 = vmul.f32 %v244, %v235
      %v256 = vmul.f32 %v248, %v236
      %v257 = vmul.f32 %v252, %v237
      %v258 = vadd.f32 %v254, %v255
      %v259 = vadd.f32 %v258, %v256
      %v260 = vadd.f32 %v259, %v257
      %v261 = vrot.slane %v260, 4
      %v262 = vadd.f32 %v260, %v261
      %v263 = vrot.slane %v262, 2
      %v264 = vadd.f32 %v262, %v263
      %v265 = vrot.slane %v264, 1
      %v266 = vadd.f32 %v264, %v265
      %268 = vset.pattern.permute.xlu0 3
      %269 = vperm.xlu0 %268, %v146
      %v270 = vpop.permute.xlu0 %269
      %v272 = vadd.f32 %v266, %v270
      %v273 = vsub.f32 0.0, %v272
      %v274 = vmul.f32 %v273, 1.442695
      %v275 = vpow.pop %v274
      %v276 = vadd.f32 %v275, 1.0
      %v277 = vrcp.pop %v276
      %278 = vst [vmem:[%s136] sm:$0x1] %v277
      %p279 = scmp.lt.s32.totalorder %s13, 1
      %s280 = scalar_select %p279, %s13, 1
      %s281 = scalar_lea.vmem %s2, %s280
      // Predicated region
      $region29: #{discriminator_forward.1} parent=27 // pred_check
        %p282 = pneg %p78
      $region30: #{discriminator_forward.1} parent=27 // pred_check_branch
        %284 = sbr.rel (%p282) target = $region32
      $region31: #{discriminator_forward.1} parent=27 // pred_region
        _
      $region32: #{discriminator_forward.1} parent=27 // pred_fallthru
        _
    $region28: #{discriminator_forward.1} parent=5 // pred_fallthru
      _
    %p285 = scmp.le.s32.totalorder 2, %s8
    // Predicated region
    $region33: #{discriminator_forward.1} parent=5 // pred_check
      %p286 = pneg %p285
    $region34: #{discriminator_forward.1} parent=5 // pred_check_branch
      %288 = sbr.rel (%p286) target = $region36
    $region35: #{discriminator_forward.1} parent=5 // pred_region
      %s289 = ssub.s32 %s8, 2
      // Predicated region
      $region37: #{discriminator_forward.1} parent=35 // pred_check
        %p290 = pneg %p84
      $region38: #{discriminator_forward.1} parent=35 // pred_check_branch
        %292 = sbr.rel (%p290) target = $region40
      $region39: #{discriminator_forward.1} parent=35 // pred_region
        %p293 = scmp.lt.s32.totalorder %s14, 1
        %s294 = scalar_select %p293, %s14, 1
        %s295 = scalar_lea.vmem %s2, %s294
      $region40: #{discriminator_forward.1} parent=35 // pred_fallthru
        _
    $region36: #{discriminator_forward.1} parent=5 // pred_fallthru
      _
  $region6: #{discriminator_forward.1} parent=0 // loop_footer
    %s12 = sadd.s32 1, %s8
  $region7: #{discriminator_forward.1} parent=0 // loop_footer_branch
    %7 = sbr.rel target = $region3
  $region8: #{discriminator_forward.1} parent=0 // loop_exit
    _

</llo_original>
